<compile_context>
chip_gen: v6e
topology: v6e:2x2x1
jax: 0.10.0
libtpu: 0.0.40
codegen_flags: <defaults>
</compile_context>

<pallas_src>
import functools

import jax
import jax.numpy as jnp
from jax.experimental import pallas as pl
from jax.experimental.pallas import tpu as pltpu

IGNORE_INDEX = -100
LANES = 128


def _round_up(x, m):
    return ((x + m - 1) // m) * m


def _ce_kernel(x_ref, t_ref, sum_out_ref, cnt_out_ref, sum_sc, cnt_sc, *,
               ignore_index, n_rows, tp, t_per_chunk, needs_mask):
    """One (batch n, pixel-chunk p, row-tile j) grid step.

    x_ref : (C, tp, 128)  logits — classes on the leading (untiled) axis, pixels fully
                          dense on (sublanes=tp, lanes=128).
    t_ref : (tp, 128)     int32 targets.
    sum_out_ref, cnt_out_ref : (1, 1) per-(n, chunk) partial sum / valid count.
    sum_sc, cnt_sc : (tp, 128) f32 dense accumulators (persist across the j sweep).
    """
    j = pl.program_id(2)

    @pl.when(j == 0)
    def _():
        sum_sc[...] = jnp.zeros_like(sum_sc)
        cnt_sc[...] = jnp.zeros_like(cnt_sc)

    x = x_ref[...].astype(jnp.float32)      # (C, tp, 128); only full-size f32 temp
    tgt = t_ref[...]                        # (tp, 128)

    valid = tgt != ignore_index
    if needs_mask:  # static: emitted only when the grid overhangs the real row count
        rb = pl.program_id(1) * t_per_chunk + j          # un-clamped row-block index
        row = rb * tp + jax.lax.broadcasted_iota(jnp.int32, tgt.shape, 0)
        valid = jnp.logical_and(valid, row < n_rows)

    # log-softmax over classes, folded:  nll = log(sum_c exp(x_c - m)) - (x_t - m)
    m = jnp.max(x, axis=0)                               # (tp, 128)
    s = jnp.zeros_like(m)
    x_t = jnp.zeros_like(m)
    for c in range(x.shape[0]):                          # static unroll over classes;
        xm_c = x[c] - m                                  # all temps stay (tp, 128)
        s = s + jnp.exp(xm_c)
        x_t = x_t + jnp.where(tgt == c, xm_c, 0.0)
    # select (not multiply) so NaN/Inf from masked / out-of-bounds lanes never leaks.
    nll = jnp.where(valid, jnp.log(s) - x_t, 0.0)

    sum_sc[...] += nll
    cnt_sc[...] += valid.astype(jnp.float32)

    @pl.when(j == pl.num_programs(2) - 1)
    def _():
        sum_out_ref[...] = jnp.sum(sum_sc[...]).reshape(1, 1)
        cnt_out_ref[...] = jnp.sum(cnt_sc[...]).reshape(1, 1)


def cross_entropy_loss_2d(inputs_nchw, targets_nhw, *, ignore_index=IGNORE_INDEX,
                          tp=None):
    """F.log_softmax(inputs, dim=1) + NLLLoss2d(weight=None, size_average=True).

    Logits are consumed in the caller's dtype (bf16 stays bf16 in HBM; the f32 upcast
    happens in-kernel), so bf16 models get half the HBM traffic for free.
    """
    N, C, H, W = inputs_nchw.shape
    HW = H * W

    # ---- layout: pixels dense on (sublanes, lanes), classes on the leading axis ----
    x = inputs_nchw.reshape(N, C, HW)
    t = targets_nhw.reshape(N, HW).astype(jnp.int32)
    HW_pad = _round_up(HW, LANES)
    if HW_pad != HW:
        # Rare fallback (real segmentation shapes have H*W % 128 == 0): pad pixels to a
        # lane multiple; padded targets are ignore_index so they contribute nothing.
        # Costs one extra pass over the logits.
        x = jnp.pad(x, ((0, 0), (0, 0), (0, HW_pad - HW)))
        t = jnp.pad(t, ((0, 0), (0, HW_pad - HW)), constant_values=ignore_index)
    R = HW_pad // LANES                      # pixel rows of 128 lanes
    x = x.reshape(N, C, R, LANES)
    t = t.reshape(N, R, LANES)

    # ---- generation-aware tile sizing + explicit VMEM limit ----
    itemsize = x.dtype.itemsize
    try:
        info = pltpu.get_tpu_info()
        vmem_cap = int(getattr(info, "vmem_capacity_bytes", 0)) or (64 << 20)
    except Exception:
        vmem_cap = 64 << 20                  # conservative (v7x-sized) fallback
    budget = min(vmem_cap * 3 // 8, 48 << 20)        # pipelined working-set target
    per_row = (2 * C * LANES * itemsize      # double-buffered logits block
               + C * LANES * 4               # in-kernel f32 copy of the block
               + 2 * LANES * 4               # double-buffered targets block
               + 12 * LANES * 4)             # row-wide f32 temps + accumulators
    if tp is None:
        tp_budget = max(8, (budget // per_row) // 8 * 8)
        tp_block_cap = max(8, ((8 << 20) // (C * LANES * itemsize)) // 8 * 8)
        if R <= 8:
            tp = R                           # full-extent block; no 8-divisibility need
        else:
            tp = min(tp_budget, tp_block_cap, _round_up(R, 8))

    T_total = pl.cdiv(R, tp)                 # row tiles per batch element
    # Two parallel pixel chunks keep both v7x TensorCores busy at small batch sizes.
    n_chunks = 2 if T_total >= 2 else 1
    T = pl.cdiv(T_total, n_chunks)           # row tiles per chunk
    last_blk = T_total - 1
    needs_mask = (n_chunks * T * tp) != R    # static: does the grid overhang the rows?

    def x_map(n, p, j):
        return (n, 0, jnp.minimum(p * T + j, last_blk), 0)

    def t_map(n, p, j):
        return (n, jnp.minimum(p * T + j, last_blk), 0)

    def o_map(n, p, j):
        return (n, p, 0, 0)

    kernel = functools.partial(_ce_kernel, ignore_index=ignore_index, n_rows=R,
                               tp=tp, t_per_chunk=T, needs_mask=needs_mask)

    vmem_limit = int(min(vmem_cap * 3 // 4, 96 << 20))

    sums, cnts = pl.pallas_call(
        kernel,
        out_shape=(
            jax.ShapeDtypeStruct((N, n_chunks, 1, 1), jnp.float32),  # per-(n,chunk) sum
            jax.ShapeDtypeStruct((N, n_chunks, 1, 1), jnp.float32),  # per-(n,chunk) cnt
        ),
        grid_spec=pltpu.PrefetchScalarGridSpec(
            num_scalar_prefetch=0,
            grid=(N, n_chunks, T),
            in_specs=[
                pl.BlockSpec((pl.Squeezed(), C, tp, LANES), x_map),
                pl.BlockSpec((pl.Squeezed(), tp, LANES), t_map),
            ],
            out_specs=(
                pl.BlockSpec((pl.Squeezed(), pl.Squeezed(), 1, 1), o_map),
                pl.BlockSpec((pl.Squeezed(), pl.Squeezed(), 1, 1), o_map),
            ),
            scratch_shapes=[
                pltpu.VMEM((tp, LANES), jnp.float32),
                pltpu.VMEM((tp, LANES), jnp.float32),
            ],
        ),
        compiler_params=pltpu.CompilerParams(
            dimension_semantics=("parallel", "parallel", "arbitrary"),
            vmem_limit_bytes=vmem_limit,
        ),
    )(x, t)

    # size_average=True -> mean over valid pixels.
    # NOTE: if every target == ignore_index this is 0/0 = NaN, matching PyTorch.
    return jnp.sum(sums) / jnp.sum(cnts)


# TODO(synk): per-class `weight` vector not implemented (module default weight=None).


def _reference_loss(inputs_nchw, targets_nhw, ignore_index=IGNORE_INDEX):
    # pure-JAX reference of F.log_softmax(dim=1) + NLLLoss2d(mean, ignore_index)
    logp = jax.nn.log_softmax(inputs_nchw.astype(jnp.float32), axis=1)
    t = targets_nhw.astype(jnp.int32)
    valid = t != ignore_index
    t_safe = jnp.where(valid, t, 0)
    picked = jnp.take_along_axis(logp, t_safe[:, None, :, :], axis=1)[:, 0]
    nll = jnp.where(valid, -picked, 0.0)
    return jnp.sum(nll) / jnp.sum(valid.astype(jnp.float32))


if __name__ == "__main__":
    key = jax.random.PRNGKey(0)
    ks = jax.random.split(key, 9)

    # primary case: N=2, C=4, 16x16 spatial (~10% ignored pixels; H*W % 128 == 0)
    N, C, H, W = 2, 4, 16, 16
    inputs = jax.random.normal(ks[0], (N, C, H, W), dtype=jnp.float32)
    targets = jax.random.randint(ks[1], (N, H, W), 0, C, dtype=jnp.int32)
    targets = jnp.where(jax.random.bernoulli(ks[2], 0.1, (N, H, W)),
                        IGNORE_INDEX, targets)
    loss = jax.block_until_ready(cross_entropy_loss_2d(inputs, targets))
    ref = jax.block_until_ready(_reference_loss(inputs, targets))
    assert jnp.allclose(loss, ref, rtol=1e-5, atol=1e-5), (loss, ref)

    # ragged case: H*W not a multiple of 128 (exercises the lane-padding fallback)
    N2, C2, H2, W2 = 2, 5, 15, 15
    inputs2 = jax.random.normal(ks[3], (N2, C2, H2, W2), dtype=jnp.float32)
    targets2 = jax.random.randint(ks[4], (N2, H2, W2), 0, C2, dtype=jnp.int32)
    targets2 = jnp.where(jax.random.bernoulli(ks[5], 0.2, (N2, H2, W2)),
                         IGNORE_INDEX, targets2)
    loss2 = jax.block_until_ready(cross_entropy_loss_2d(inputs2, targets2))
    ref2 = jax.block_until_ready(_reference_loss(inputs2, targets2))
    assert jnp.allclose(loss2, ref2, rtol=1e-5, atol=1e-5), (loss2, ref2)

    # multi-tile case: small forced row tile exercises the chunked pixel sweep, the
    # accumulator init/finalize, the clamped index_map, and the ragged row mask.
    N3, C3, H3, W3 = 2, 4, 48, 48            # R = 18 rows; tp=8 -> 3 tiles, 2 chunks
    inputs3 = jax.random.normal(ks[6], (N3, C3, H3, W3), dtype=jnp.float32)
    targets3 = jax.random.randint(ks[7], (N3, H3, W3), 0, C3, dtype=jnp.int32)
    targets3 = jnp.where(jax.random.bernoulli(ks[8], 0.15, (N3, H3, W3)),
                         IGNORE_INDEX, targets3)
    loss3 = jax.block_until_ready(cross_entropy_loss_2d(inputs3, targets3, tp=8))
    ref3 = jax.block_until_ready(_reference_loss(inputs3, targets3))
    assert jnp.allclose(loss3, ref3, rtol=1e-5, atol=1e-5), (loss3, ref3)

    print("KERNEL_OK")
</pallas_src>

<mosaic_0001>
module attributes {stable_mosaic.version = 11 : i64} {
  func.func @_ce_kernel(%arg0: i32, %arg1: i32, %arg2: i32, %arg3: memref<1x4x2x128xf32, #tpu.memory_space<vmem>>, %arg4: memref<1x2x128xi32, #tpu.memory_space<vmem>>, %arg5: memref<1x1x1x1xf32, #tpu.memory_space<vmem>>, %arg6: memref<1x1x1x1xf32, #tpu.memory_space<vmem>>, %arg7: memref<2x128xf32, #tpu.memory_space<vmem>>, %arg8: memref<2x128xf32, #tpu.memory_space<vmem>>) attributes {dimension_semantics = [#tpu.dimension_semantics<parallel>, #tpu.dimension_semantics<parallel>, #tpu.dimension_semantics<arbitrary>], iteration_bounds = array<i64: 2, 1, 1>, scalar_prefetch = 0 : i64, scratch_operands = 2 : i64, tpu.core_type = #tpu.core_type<tc>, window_params = [{transform_indices = @transform_0, window_bounds = array<i64: 1, 4, 2, 128>}, {transform_indices = @transform_1, window_bounds = array<i64: 1, 2, 128>}, {transform_indices = @transform_2, window_bounds = array<i64: 1, 1, 1, 1>}, {transform_indices = @transform_3, window_bounds = array<i64: 1, 1, 1, 1>}]} {
    %c0_i32 = arith.constant 0 : i32
    %0 = arith.cmpi eq, %arg2, %c0_i32 : i32
    %1 = arith.extui %0 : i1 to i32
    %c0_i32_0 = arith.constant 0 : i32
    %2 = arith.cmpi ne, %1, %c0_i32_0 : i32
    scf.if %2 {
      %cst_25 = arith.constant 0.000000e+00 : f32
      %67 = vector.broadcast %cst_25 : f32 to vector<2x128xf32>
      %c0_26 = arith.constant 0 : index
      %c0_27 = arith.constant 0 : index
      %68 = vector.load %arg7[%c0_26, %c0_27] : memref<2x128xf32, #tpu.memory_space<vmem>>, vector<2x128xf32>
      tpu.vector_store %arg7[%c0_26, %c0_27], %67 {strides = array<i32>} : memref<2x128xf32, #tpu.memory_space<vmem>>, vector<2x128xf32>,
      %cst_28 = arith.constant 0.000000e+00 : f32
      %69 = vector.broadcast %cst_28 : f32 to vector<2x128xf32>
      %c0_29 = arith.constant 0 : index
      %c0_30 = arith.constant 0 : index
      %70 = vector.load %arg8[%c0_29, %c0_30] : memref<2x128xf32, #tpu.memory_space<vmem>>, vector<2x128xf32>
      tpu.vector_store %arg8[%c0_29, %c0_30], %69 {strides = array<i32>} : memref<2x128xf32, #tpu.memory_space<vmem>>, vector<2x128xf32>,
    } else {
    }
    %c0 = arith.constant 0 : index
    %c0_1 = arith.constant 0 : index
    %c0_2 = arith.constant 0 : index
    %c0_3 = arith.constant 0 : index
    %3 = vector.load %arg3[%c0, %c0_1, %c0_2, %c0_3] : memref<1x4x2x128xf32, #tpu.memory_space<vmem>>, vector<1x4x2x128xf32>
    %4 = vector.shape_cast %3 : vector<1x4x2x128xf32> to vector<4x2x128xf32>
    %c0_4 = arith.constant 0 : index
    %c0_5 = arith.constant 0 : index
    %c0_6 = arith.constant 0 : index
    %5 = vector.load %arg4[%c0_4, %c0_5, %c0_6] : memref<1x2x128xi32, #tpu.memory_space<vmem>>, vector<1x2x128xi32>
    %6 = vector.shape_cast %5 : vector<1x2x128xi32> to vector<2x128xi32>
    %c-100_i32 = arith.constant -100 : i32
    %7 = vector.broadcast %c-100_i32 : i32 to vector<2x128xi32>
    %8 = arith.cmpi ne, %6, %7 : vector<2x128xi32>
    %cst = arith.constant dense<0xFF800000> : vector<2x128xf32>
    %9 = vector.multi_reduction <maximumf>, %4, %cst [0] : vector<4x2x128xf32> to vector<2x128xf32>
    %cst_7 = arith.constant 0.000000e+00 : f32
    %10 = vector.broadcast %cst_7 : f32 to vector<2x128xf32>
    %cst_8 = arith.constant 0.000000e+00 : f32
    %11 = vector.broadcast %cst_8 : f32 to vector<2x128xf32>
    %12 = vector.extract_strided_slice %4 {offsets = [0, 0, 0], sizes = [1, 2, 128], strides = [1, 1, 1]} : vector<4x2x128xf32> to vector<1x2x128xf32>
    %13 = vector.shape_cast %12 : vector<1x2x128xf32> to vector<2x128xf32>
    %14 = arith.subf %13, %9 : vector<2x128xf32>
    %15 = math.exp %14 : vector<2x128xf32>
    %16 = arith.addf %10, %15 : vector<2x128xf32>
    %c0_i32_9 = arith.constant 0 : i32
    %17 = vector.broadcast %c0_i32_9 : i32 to vector<2x128xi32>
    %18 = arith.cmpi eq, %6, %17 : vector<2x128xi32>
    %cst_10 = arith.constant 0.000000e+00 : f32
    %19 = vector.broadcast %cst_10 : f32 to vector<2x128xf32>
    %20 = arith.select %18, %14, %19 : vector<2x128xi1>, vector<2x128xf32>
    %21 = arith.addf %11, %20 : vector<2x128xf32>
    %22 = vector.extract_strided_slice %4 {offsets = [1, 0, 0], sizes = [1, 2, 128], strides = [1, 1, 1]} : vector<4x2x128xf32> to vector<1x2x128xf32>
    %23 = vector.shape_cast %22 : vector<1x2x128xf32> to vector<2x128xf32>
    %24 = arith.subf %23, %9 : vector<2x128xf32>
    %25 = math.exp %24 : vector<2x128xf32>
    %26 = arith.addf %16, %25 : vector<2x128xf32>
    %c1_i32 = arith.constant 1 : i32
    %27 = vector.broadcast %c1_i32 : i32 to vector<2x128xi32>
    %28 = arith.cmpi eq, %6, %27 : vector<2x128xi32>
    %cst_11 = arith.constant 0.000000e+00 : f32
    %29 = vector.broadcast %cst_11 : f32 to vector<2x128xf32>
    %30 = arith.select %28, %24, %29 : vector<2x128xi1>, vector<2x128xf32>
    %31 = arith.addf %21, %30 : vector<2x128xf32>
    %32 = vector.extract_strided_slice %4 {offsets = [2, 0, 0], sizes = [1, 2, 128], strides = [1, 1, 1]} : vector<4x2x128xf32> to vector<1x2x128xf32>
    %33 = vector.shape_cast %32 : vector<1x2x128xf32> to vector<2x128xf32>
    %34 = arith.subf %33, %9 : vector<2x128xf32>
    %35 = math.exp %34 : vector<2x128xf32>
    %36 = arith.addf %26, %35 : vector<2x128xf32>
    %c2_i32 = arith.constant 2 : i32
    %37 = vector.broadcast %c2_i32 : i32 to vector<2x128xi32>
    %38 = arith.cmpi eq, %6, %37 : vector<2x128xi32>
    %cst_12 = arith.constant 0.000000e+00 : f32
    %39 = vector.broadcast %cst_12 : f32 to vector<2x128xf32>
    %40 = arith.select %38, %34, %39 : vector<2x128xi1>, vector<2x128xf32>
    %41 = arith.addf %31, %40 : vector<2x128xf32>
    %42 = vector.extract_strided_slice %4 {offsets = [3, 0, 0], sizes = [1, 2, 128], strides = [1, 1, 1]} : vector<4x2x128xf32> to vector<1x2x128xf32>
    %43 = vector.shape_cast %42 : vector<1x2x128xf32> to vector<2x128xf32>
    %44 = arith.subf %43, %9 : vector<2x128xf32>
    %45 = math.exp %44 : vector<2x128xf32>
    %46 = arith.addf %36, %45 : vector<2x128xf32>
    %c3_i32 = arith.constant 3 : i32
    %47 = vector.broadcast %c3_i32 : i32 to vector<2x128xi32>
    %48 = arith.cmpi eq, %6, %47 : vector<2x128xi32>
    %cst_13 = arith.constant 0.000000e+00 : f32
    %49 = vector.broadcast %cst_13 : f32 to vector<2x128xf32>
    %50 = arith.select %48, %44, %49 : vector<2x128xi1>, vector<2x128xf32>
    %51 = arith.addf %41, %50 : vector<2x128xf32>
    %52 = math.log %46 : vector<2x128xf32>
    %53 = arith.subf %52, %51 : vector<2x128xf32>
    %cst_14 = arith.constant 0.000000e+00 : f32
    %54 = vector.broadcast %cst_14 : f32 to vector<2x128xf32>
    %55 = arith.select %8, %53, %54 : vector<2x128xi1>, vector<2x128xf32>
    %c0_15 = arith.constant 0 : index
    %c0_16 = arith.constant 0 : index
    %56 = vector.load %arg7[%c0_15, %c0_16] : memref<2x128xf32, #tpu.memory_space<vmem>>, vector<2x128xf32>
    %57 = arith.addf %56, %55 : vector<2x128xf32>
    %c0_17 = arith.constant 0 : index
    %c0_18 = arith.constant 0 : index
    %58 = vector.load %arg7[%c0_17, %c0_18] : memref<2x128xf32, #tpu.memory_space<vmem>>, vector<2x128xf32>
    tpu.vector_store %arg7[%c0_17, %c0_18], %57 {strides = array<i32>} : memref<2x128xf32, #tpu.memory_space<vmem>>, vector<2x128xf32>,
    %c0_19 = arith.constant 0 : index
    %c0_20 = arith.constant 0 : index
    %59 = vector.load %arg8[%c0_19, %c0_20] : memref<2x128xf32, #tpu.memory_space<vmem>>, vector<2x128xf32>
    %60 = arith.extui %8 : vector<2x128xi1> to vector<2x128xi32>
    %61 = arith.sitofp %60 : vector<2x128xi32> to vector<2x128xf32>
    %62 = arith.addf %59, %61 : vector<2x128xf32>
    %c0_21 = arith.constant 0 : index
    %c0_22 = arith.constant 0 : index
    %63 = vector.load %arg8[%c0_21, %c0_22] : memref<2x128xf32, #tpu.memory_space<vmem>>, vector<2x128xf32>
    tpu.vector_store %arg8[%c0_21, %c0_22], %62 {strides = array<i32>} : memref<2x128xf32, #tpu.memory_space<vmem>>, vector<2x128xf32>,
    %c0_i32_23 = arith.constant 0 : i32
    %64 = arith.cmpi eq, %arg2, %c0_i32_23 : i32
    %65 = arith.extui %64 : i1 to i32
    %c0_i32_24 = arith.constant 0 : i32
    %66 = arith.cmpi ne, %65, %c0_i32_24 : i32
    scf.if %66 {
      %c0_25 = arith.constant 0 : index
      %c0_26 = arith.constant 0 : index
      %67 = vector.load %arg7[%c0_25, %c0_26] : memref<2x128xf32, #tpu.memory_space<vmem>>, vector<2x128xf32>
      %68 = vector.shape_cast %67 : vector<2x128xf32> to vector<1x2x128xf32>
      %cst_27 = arith.constant dense<0.000000e+00> : vector<1xf32>
      %69 = vector.multi_reduction <add>, %68, %cst_27 [1, 2] : vector<1x2x128xf32> to vector<1xf32>
      %70 = vector.shape_cast %69 : vector<1xf32> to vector<1x1x1xf32>
      %71 = vector.extract %70[0, 0, 0] : f32 from vector<1x1x1xf32>
      %72 = vector.broadcast %71 : f32 to vector<1x1xf32>
      %c0_28 = arith.constant 0 : index
      %c0_29 = arith.constant 0 : index
      %c0_30 = arith.constant 0 : index
      %c0_31 = arith.constant 0 : index
      %73 = vector.load %arg5[%c0_28, %c0_29, %c0_30, %c0_31] : memref<1x1x1x1xf32, #tpu.memory_space<vmem>>, vector<1x1x1x1xf32>
      %74 = vector.shape_cast %73 : vector<1x1x1x1xf32> to vector<1x1xf32>
      %75 = vector.shape_cast %72 : vector<1x1xf32> to vector<1x1x1x1xf32>
      tpu.vector_store %arg5[%c0_28, %c0_29, %c0_30, %c0_31], %75 {strides = array<i32>} : memref<1x1x1x1xf32, #tpu.memory_space<vmem>>, vector<1x1x1x1xf32>,
      %c0_32 = arith.constant 0 : index
      %c0_33 = arith.constant 0 : index
      %76 = vector.load %arg8[%c0_32, %c0_33] : memref<2x128xf32, #tpu.memory_space<vmem>>, vector<2x128xf32>
      %77 = vector.shape_cast %76 : vector<2x128xf32> to vector<1x2x128xf32>
      %cst_34 = arith.constant dense<0.000000e+00> : vector<1xf32>
      %78 = vector.multi_reduction <add>, %77, %cst_34 [1, 2] : vector<1x2x128xf32> to vector<1xf32>
      %79 = vector.shape_cast %78 : vector<1xf32> to vector<1x1x1xf32>
      %80 = vector.extract %79[0, 0, 0] : f32 from vector<1x1x1xf32>
      %81 = vector.broadcast %80 : f32 to vector<1x1xf32>
      %c0_35 = arith.constant 0 : index
      %c0_36 = arith.constant 0 : index
      %c0_37 = arith.constant 0 : index
      %c0_38 = arith.constant 0 : index
      %82 = vector.load %arg6[%c0_35, %c0_36, %c0_37, %c0_38] : memref<1x1x1x1xf32, #tpu.memory_space<vmem>>, vector<1x1x1x1xf32>
      %83 = vector.shape_cast %82 : vector<1x1x1x1xf32> to vector<1x1xf32>
      %84 = vector.shape_cast %81 : vector<1x1xf32> to vector<1x1x1x1xf32>
      tpu.vector_store %arg6[%c0_35, %c0_36, %c0_37, %c0_38], %84 {strides = array<i32>} : memref<1x1x1x1xf32, #tpu.memory_space<vmem>>, vector<1x1x1x1xf32>,
    } else {
    }
    return
  }
  func.func @transform_0(%arg0: i32, %arg1: i32, %arg2: i32) -> (i32, i32, i32, i32) {
    %c1_i32 = arith.constant 1 : i32
    %0 = arith.muli %arg1, %c1_i32 : i32
    %1 = arith.addi %0, %arg2 : i32
    %c0_i32 = arith.constant 0 : i32
    %2 = arith.minsi %1, %c0_i32 : i32
    %c0_i32_0 = arith.constant 0 : i32
    %c0_i32_1 = arith.constant 0 : i32
    %c0_i32_2 = arith.constant 0 : i32
    return %arg0, %c0_i32_0, %2, %c0_i32_1 : i32, i32, i32, i32
  }
  func.func @transform_1(%arg0: i32, %arg1: i32, %arg2: i32) -> (i32, i32, i32) {
    %c1_i32 = arith.constant 1 : i32
    %0 = arith.muli %arg1, %c1_i32 : i32
    %1 = arith.addi %0, %arg2 : i32
    %c0_i32 = arith.constant 0 : i32
    %2 = arith.minsi %1, %c0_i32 : i32
    %c0_i32_0 = arith.constant 0 : i32
    %c0_i32_1 = arith.constant 0 : i32
    return %arg0, %2, %c0_i32_0 : i32, i32, i32
  }
  func.func @transform_2(%arg0: i32, %arg1: i32, %arg2: i32) -> (i32, i32, i32, i32) {
    %c0_i32 = arith.constant 0 : i32
    %c0_i32_0 = arith.constant 0 : i32
    %c0_i32_1 = arith.constant 0 : i32
    return %arg0, %arg1, %c0_i32, %c0_i32_0 : i32, i32, i32, i32
  }
  func.func @transform_3(%arg0: i32, %arg1: i32, %arg2: i32) -> (i32, i32, i32, i32) {
    %c0_i32 = arith.constant 0 : i32
    %c0_i32_0 = arith.constant 0 : i32
    %c0_i32_1 = arith.constant 0 : i32
    return %arg0, %arg1, %c0_i32, %c0_i32_0 : i32, i32, i32, i32
  }
}

</mosaic_0001>

<llo_original>
// kernel: tpu_custom_call.1
$region0: #{tpu_custom_call.1}
  #allocation0 [shape = 'u32[]', space=smem, size = 0x4, offset = 0x4, fixed_abs, tag = 'smem constant byte address 0x4 - core index']
  #allocation1 [shape = 'u32[144,128]{1,0:T(1,128)}', space=vmem, size = 0x12000, scoped, tag = 'internal scratch']
  #allocation2 [shape = 'f32[2,128]{1,0:T(2,128)}', space=vmem, size = 0x400, scoped, tag = 'scratch operand']
  #allocation3 [shape = 'f32[2,128]{1,0:T(2,128)}', space=vmem, size = 0x400, scoped, tag = 'scratch operand']
  %s0 = inlined_call_operand.hbm [shape: f32[2,4,2,128], index: 0, kind: input, shape index: {}]
  %s1 = inlined_call_operand.hbm [shape: s32[2,2,128], index: 1, kind: input, shape index: {}]
  %s2 = inlined_call_operand.vmem [shape: f32[2,1,1,1], index: 2, kind: output, shape index: {0}]
  %s3 = inlined_call_operand.vmem [shape: f32[2,1,1,1], index: 3, kind: output, shape index: {1}]
  %4 = xla_tuple %s2, %s3
  %s5 = sld [smem:[#allocation0]]
  $region65: #{tpu_custom_call.1} parent=0
    _
  %s7 = ssub.s32 1, %s5
  %s8 = scalar_select 0, %s7, %s5
  $region1: #{tpu_custom_call.1} parent=0
    #allocation4 [shape = 'u8[8192]{0}', space=vmem, size = 0x2000, scoped, tag = 'input window, operand 0']
    #allocation5 [shape = 's32[2]{0}', space=sflag, size = 0x8, scoped, tag = 'scoped memory for tpu_custom_call.1']
    #allocation6 [shape = 'u8[2048]{0}', space=vmem, size = 0x800, scoped, tag = 'input window, operand 1']
    #allocation7 [shape = 's32[2]{0}', space=sflag, size = 0x8, scoped, tag = 'scoped memory for tpu_custom_call.1']
    %9 = vsyncpa [#allocation5], 0
    %s10 = scalar_lea.sflag [#allocation5], 1
    %11 = vsyncpa %s10, 0
    %12 = vsyncpa [#allocation7], 0
    %s13 = scalar_lea.sflag [#allocation7], 1
    %14 = vsyncpa %s13, 0
    loop: start=0, step=1, limit=4
    $region2: #{tpu_custom_call.1} parent=1 // loop_pre_header
      _
    $region3: #{tpu_custom_call.1} parent=1 // loop_header
      %s16 = sphi 0, %s20
      %p17 = scmp.ge.s32.totalorder %s16, 4
      %s23 = sphi 0, %s42
      %s24 = sphi 0, %s38
      %s25 = sphi 0, %s34
      %s26 = sphi 0, %s23
      %s27 = sphi 0, %s24
      %s28 = sphi 0, %s25
      %s29 = sphi 0, %s26
      %s30 = sphi 0, %s27
      %s31 = sphi 0, %s28
      %s53 = sphi 0, %s55
      %s56 = sphi 0, %s53
      %s57 = sphi 0, %s56
      %s73 = sphi 0, %s57
      %s87 = sphi 0, %s89
      %s90 = sphi 0, %s87
      %s91 = sphi 0, %s90
      %s107 = sphi 0, %s91
      %s115 = sphi 0, %s117
      %s118 = sphi 0, %s115
      %s119 = sphi 0, %s118
      %s135 = sphi 0, %s119
      %s143 = sphi 0, %s145
      %s146 = sphi 0, %s143
      %s147 = sphi 0, %s146
      %s163 = sphi 0, %s147
    $region4: #{tpu_custom_call.1} parent=1 // loop_header_branch
      %19 = sbr.rel (%p17) target = $region8
    $region5: #{tpu_custom_call.1} parent=1 // loop_body
      %s21 = ssub.s32 %s16, 1
      %s22 = ssub.s32 %s16, 2
      %s32 = sadd.s32 1, %s25
      %p33 = scmp.ge.s32.totalorder %s32, 1
      %s34 = scalar_select %p33, 0, %s32
      %s35 = sadd.s32 1, %s24
      %s36 = scalar_select %p33, %s35, %s24
      %p37 = scmp.ge.s32.totalorder %s36, 1
      %s38 = scalar_select %p37, 0, %s36
      %s39 = sadd.s32 1, %s23
      %s40 = scalar_select %p37, %s39, %s23
      %p41 = scmp.ge.s32.totalorder %s40, 2
      %s42 = scalar_select %p41, 0, %s40
      %s43 = sadd.s32 %s24, %s25
      %p44 = scmp.lt.s32.totalorder %s43, 0
      %s45 = scalar_select %p44, %s43, 0
      %s46 = sadd.s32 %s38, %s34
      %p47 = scmp.lt.s32.totalorder %s46, 0
      %s48 = scalar_select %p47, %s46, 0
      %s49 = ssub.s32 %s23, %s42
      %s50 = ssub.s32 %s45, %s48
      %s51 = sor.u32 %s49, %s50
      %p52 = scmp.eq.s32.totalorder %s51, 0
      %s54 = sadd.s32 %s53, 1
      %s55 = scalar_select %p52, %s53, %s54
      %p58 = pneg %p52
      %p59 = scmp.eq.s32.totalorder %s16, 1
      %p60 = por %p58, %p59
      %p61 = scmp.ne.s32.totalorder %s53, %s56
      %p62 = scmp.eq.s32.totalorder %s16, 0
      %p63 = por %p61, %p62
      %p64 = scmp.ne.s32.totalorder %s53, %s56
      %p65 = scmp.eq.s32.totalorder %s21, 1
      %p66 = por %p64, %p65
      %p67 = scmp.ne.s32.totalorder %s56, %s57
      %p68 = scmp.eq.s32.totalorder %s21, 0
      %p69 = por %p67, %p68
      %p70 = scmp.ne.s32.totalorder %s56, %s57
      %p71 = scmp.eq.s32.totalorder %s22, 1
      %p72 = por %p70, %p71
      %p74 = scmp.ne.s32.totalorder %s57, %s73
      %p75 = scmp.eq.s32.totalorder %s22, 0
      %p76 = por %p74, %p75
      %s77 = sadd.s32 %s24, %s25
      %p78 = scmp.lt.s32.totalorder %s77, 0
      %s79 = scalar_select %p78, %s77, 0
      %s80 = sadd.s32 %s38, %s34
      %p81 = scmp.lt.s32.totalorder %s80, 0
      %s82 = scalar_select %p81, %s80, 0
      %s83 = ssub.s32 %s23, %s42
      %s84 = ssub.s32 %s79, %s82
      %s85 = sor.u32 %s83, %s84
      %p86 = scmp.eq.s32.totalorder %s85, 0
      %s88 = sadd.s32 %s87, 1
      %s89 = scalar_select %p86, %s87, %s88
      %p92 = pneg %p86
      %p93 = scmp.eq.s32.totalorder %s16, 1
      %p94 = por %p92, %p93
      %p95 = scmp.ne.s32.totalorder %s87, %s90
      %p96 = scmp.eq.s32.totalorder %s16, 0
      %p97 = por %p95, %p96
      %p98 = scmp.ne.s32.totalorder %s87, %s90
      %p99 = scmp.eq.s32.totalorder %s21, 1
      %p100 = por %p98, %p99
      %p101 = scmp.ne.s32.totalorder %s90, %s91
      %p102 = scmp.eq.s32.totalorder %s21, 0
      %p103 = por %p101, %p102
      %p104 = scmp.ne.s32.totalorder %s90, %s91
      %p105 = scmp.eq.s32.totalorder %s22, 1
      %p106 = por %p104, %p105
      %p108 = scmp.ne.s32.totalorder %s91, %s107
      %p109 = scmp.eq.s32.totalorder %s22, 0
      %p110 = por %p108, %p109
      %s111 = ssub.s32 %s23, %s42
      %s112 = ssub.s32 %s24, %s38
      %s113 = sor.u32 %s111, %s112
      %p114 = scmp.eq.s32.totalorder %s113, 0
      %s116 = sadd.s32 %s115, 1
      %s117 = scalar_select %p114, %s115, %s116
      %p120 = pneg %p114
      %p121 = scmp.eq.s32.totalorder %s16, 1
      %p122 = por %p120, %p121
      %p123 = scmp.ne.s32.totalorder %s115, %s118
      %p124 = scmp.eq.s32.totalorder %s16, 0
      %p125 = por %p123, %p124
      %p126 = scmp.ne.s32.totalorder %s115, %s118
      %p127 = scmp.eq.s32.totalorder %s21, 1
      %p128 = por %p126, %p127
      %p129 = scmp.ne.s32.totalorder %s118, %s119
      %p130 = scmp.eq.s32.totalorder %s21, 0
      %p131 = por %p129, %p130
      %p132 = scmp.ne.s32.totalorder %s118, %s119
      %p133 = scmp.eq.s32.totalorder %s22, 1
      %p134 = por %p132, %p133
      %p136 = scmp.ne.s32.totalorder %s119, %s135
      %p137 = scmp.eq.s32.totalorder %s22, 0
      %p138 = por %p136, %p137
      %s139 = ssub.s32 %s23, %s42
      %s140 = ssub.s32 %s24, %s38
      %s141 = sor.u32 %s139, %s140
      %p142 = scmp.eq.s32.totalorder %s141, 0
      %s144 = sadd.s32 %s143, 1
      %s145 = scalar_select %p142, %s143, %s144
      %p148 = pneg %p142
      %p149 = scmp.eq.s32.totalorder %s16, 1
      %p150 = por %p148, %p149
      %p151 = scmp.ne.s32.totalorder %s143, %s146
      %p152 = scmp.eq.s32.totalorder %s16, 0
      %p153 = por %p151, %p152
      %p154 = scmp.ne.s32.totalorder %s143, %s146
      %p155 = scmp.eq.s32.totalorder %s21, 1
      %p156 = por %p154, %p155
      %p157 = scmp.ne.s32.totalorder %s146, %s147
      %p158 = scmp.eq.s32.totalorder %s21, 0
      %p159 = por %p157, %p158
      %p160 = scmp.ne.s32.totalorder %s146, %s147
      %p161 = scmp.eq.s32.totalorder %s22, 1
      %p162 = por %p160, %p161
      %p164 = scmp.ne.s32.totalorder %s147, %s163
      %p165 = scmp.eq.s32.totalorder %s22, 0
      %p166 = por %p164, %p165
      %p167 = scmp.le.s32.totalorder 1, %s16
      %p168 = scmp.lt.s32.totalorder %s16, 3
      %p169 = pnand %p167, %p168
      %p170 = pneg %p169
      // Predicated region
      $region9: #{tpu_custom_call.1} parent=5 // pred_check
        _
      $region10: #{tpu_custom_call.1} parent=5 // pred_check_branch
        %172 = sbr.rel (%p169) target = $region12
      $region11: #{tpu_custom_call.1} parent=5 // pred_region
        %s173 = ssub.s32 %s16, 1
      $region12: #{tpu_custom_call.1} parent=5 // pred_fallthru
        _
      %p174 = scmp.lt.s32.totalorder %s16, 2
      // Predicated region
      $region13: #{tpu_custom_call.1} parent=5 // pred_check
        %p175 = pneg %p174
      $region14: #{tpu_custom_call.1} parent=5 // pred_check_branch
        %177 = sbr.rel (%p175) target = $region16
      $region15: #{tpu_custom_call.1} parent=5 // pred_region
        // Predicated region
        $region17: #{tpu_custom_call.1} parent=15 // pred_check
          %p178 = pneg %p63
        $region18: #{tpu_custom_call.1} parent=15 // pred_check_branch
          %180 = sbr.rel (%p178) target = $region20
        $region19: #{tpu_custom_call.1} parent=15 // pred_region
          %s181 = sand.u32 %s53, 1
          %s182 = scalar_lea.sflag [#allocation5], %s181
          %s183 = sand.u32 %s53, 1
          %s184 = smul.addr %s183, 8
          %s185 = scalar_lea.vmem [#allocation4], %s184
          %s186 = sadd.s32 %s24, %s25
          %p187 = scmp.lt.s32.totalorder %s186, 0
          %s188 = scalar_select %p187, %s186, 0
          %s190 = ssub.s32 128, 128
          %191 = vsyncadd %s182, %s190
          %s192 = smul.addr %s23, 4
          %s193 = sadd.s32 %s188, %s192
          %s194 = smul.addr %s193, 32
          %s195 = scalar_lea.hbm %s0, %s194
          %s196 = sshll.u32 %s185, 4
          %s197 = int_to_ptr.vmem [resolvable:$true] %s196
          %202 = dma.hbm_to_vmem [thread:$0]  %s195, 128, %s197, %s182, 32, 32, 2
        $region20: #{tpu_custom_call.1} parent=15 // pred_fallthru
          _
        // Predicated region
        $region21: #{tpu_custom_call.1} parent=15 // pred_check
          %p203 = pneg %p97
        $region22: #{tpu_custom_call.1} parent=15 // pred_check_branch
          %205 = sbr.rel (%p203) target = $region24
        $region23: #{tpu_custom_call.1} parent=15 // pred_region
          %s206 = sand.u32 %s87, 1
          %s207 = scalar_lea.sflag [#allocation7], %s206
          %s208 = sand.u32 %s87, 1
          %s209 = smul.addr %s208, 2
          %s210 = scalar_lea.vmem [#allocation6], %s209
          %s211 = sadd.s32 %s24, %s25
          %p212 = scmp.lt.s32.totalorder %s211, 0
          %s213 = scalar_select %p212, %s211, 0
          %s215 = ssub.s32 32, 32
          %216 = vsyncadd %s207, %s215
          %s217 = sadd.s32 %s213, %s23
          %s218 = smul.addr %s217, 32
          %s219 = scalar_lea.hbm %s1, %s218
          %s221 = sshll.u32 %s210, 4
          %s222 = int_to_ptr.vmem [resolvable:$true] %s221
          %224 = dma.hbm_to_vmem [thread:$0]  %s219, 32, %s222, %s207
        $region24: #{tpu_custom_call.1} parent=15 // pred_fallthru
          _
      $region16: #{tpu_custom_call.1} parent=5 // pred_fallthru
        _
      %p225 = scmp.le.s32.totalorder 1, %s16
      %p226 = scmp.lt.s32.totalorder %s16, 3
      %p227 = pnand %p225, %p226
      %p228 = pneg %p227
      // Predicated region
      $region25: #{tpu_custom_call.1} parent=5 // pred_check
        _
      $region26: #{tpu_custom_call.1} parent=5 // pred_check_branch
        %230 = sbr.rel (%p227) target = $region28
      $region27: #{tpu_custom_call.1} parent=5 // pred_region
        %s231 = ssub.s32 %s16, 1
        %s232 = sand.u32 %s56, 1
        %s233 = scalar_lea.sflag [#allocation5], %s232
        %s234 = sand.u32 %s56, 1
        %s235 = smul.addr %s234, 8
        %s236 = scalar_lea.vmem [#allocation4], %s235
        // Predicated region
        $region29: #{tpu_custom_call.1} parent=27 // pred_check
          %p237 = pneg %p69
        $region30: #{tpu_custom_call.1} parent=27 // pred_check_branch
          %239 = sbr.rel (%p237) target = $region32
        $region31: #{tpu_custom_call.1} parent=27 // pred_region
          %240 = dma.done %s233, 128
        $region32: #{tpu_custom_call.1} parent=27 // pred_fallthru
          _
        %s241 = sand.u32 %s90, 1
        %s242 = scalar_lea.sflag [#allocation7], %s241
        %s243 = sand.u32 %s90, 1
        %s244 = smul.addr %s243, 2
        %s245 = scalar_lea.vmem [#allocation6], %s244
        // Predicated region
        $region33: #{tpu_custom_call.1} parent=27 // pred_check
          %p246 = pneg %p103
        $region34: #{tpu_custom_call.1} parent=27 // pred_check_branch
          %248 = sbr.rel (%p246) target = $region36
        $region35: #{tpu_custom_call.1} parent=27 // pred_region
          %249 = dma.done %s242, 32
        $region36: #{tpu_custom_call.1} parent=27 // pred_fallthru
          _
        %s250 = sand.u32 %s56, 1
        %s251 = scalar_lea.sflag [#allocation5], %s250
        %s252 = sand.u32 %s56, 1
        %s253 = smul.addr %s252, 8
        %s254 = scalar_lea.vmem [#allocation4], %s253
        %p255 = pneg %p69
        %p256 = pneg %p66
        %s257 = sand.u32 %s90, 1
        %s258 = scalar_lea.sflag [#allocation7], %s257
        %s259 = sand.u32 %s90, 1
        %s260 = smul.addr %s259, 2
        %s261 = scalar_lea.vmem [#allocation6], %s260
        %p262 = pneg %p103
        %p263 = pneg %p100
        %p264 = pneg %p131
        %p265 = pneg %p128
        %p266 = scmp.lt.s32.totalorder %s26, 1
        %s267 = scalar_select %p266, %s26, 1
        %p268 = scmp.lt.s32.totalorder %s27, 0
        %s269 = scalar_select %p268, %s27, 0
        %s270 = sadd.s32 %s269, %s267
        %s271 = scalar_lea.vmem %s2, %s270
        %p272 = pneg %p159
        %p273 = pneg %p156
        %p274 = scmp.lt.s32.totalorder %s26, 1
        %s275 = scalar_select %p274, %s26, 1
        %p276 = scmp.lt.s32.totalorder %s27, 0
        %s277 = scalar_select %p276, %s27, 0
        %s278 = sadd.s32 %s277, %s275
        %s279 = scalar_lea.vmem %s3, %s278
        %s280 = sadd.s32 %s27, %s28
        %p281 = scmp.lt.s32.totalorder %s280, 0
        %s282 = scalar_select %p281, %s280, 0
        %s283 = sadd.s32 %s27, %s28
        %p284 = scmp.lt.s32.totalorder %s283, 0
        %s285 = scalar_select %p284, %s283, 0
        %p286 = scmp.lt.s32.totalorder %s26, 1
        %s287 = scalar_select %p286, %s26, 1
        %p288 = scmp.lt.s32.totalorder %s27, 0
        %s289 = scalar_select %p288, %s27, 0
        %s290 = sadd.s32 %s289, %s287
        %s291 = scalar_lea.vmem %s2, %s290
        %p292 = scmp.lt.s32.totalorder %s26, 1
        %s293 = scalar_select %p292, %s26, 1
        %p294 = scmp.lt.s32.totalorder %s27, 0
        %s295 = scalar_select %p294, %s27, 0
        %s296 = sadd.s32 %s295, %s293
        %s297 = scalar_lea.vmem %s3, %s296
        %p298 = scmp.eq.s32.totalorder %s28, 0
        // Predicated region
        $region37: #{tpu_custom_call.1} parent=27 // pred_check
          %p299 = pneg %p298
        $region38: #{tpu_custom_call.1} parent=27 // pred_check_branch
          %301 = sbr.rel (%p299) target = $region40
        $region39: #{tpu_custom_call.1} parent=27 // pred_region
          %302 = vst [vmem:[#allocation2] sm:$0x3] 0.0
          %303 = vst [vmem:[#allocation3] sm:$0x3] 0.0
        $region40: #{tpu_custom_call.1} parent=27 // pred_fallthru
          _
        %v304 = vld [vmem:[%s236] sm:$0x3]
        %v305 = vld [vmem:[%s236 + $0x2] sm:$0x3]
        %v306 = vld [vmem:[%s236 + $0x4] sm:$0x3]
        %v307 = vld [vmem:[%s236 + $0x6] sm:$0x3]
        %v308 = vld [vmem:[%s245] sm:$0x3]
        %vm309 = vcmp.ne.s32.totalorder %v308, 4294967196
        %vm310 = vcmask 1041408
        %v311 = vsel %vm310, %v304, -inf
        %v312 = vsel %vm310, %v305, -inf
        %v313 = vsel %vm310, %v306, -inf
        %v314 = vsel %vm310, %v307, -inf
        %v315 = vmax.f32 %v311, %v312
        %v316 = vmax.f32 %v313, %v314
        %v317 = vmax.f32 %v315, %v316
        %v318 = vsub.f32 %v304, %v317
        %v319 = vmul.f32 %v318, 1.442695
        %v320 = vpow.pop %v319
        %v321 = vadd.f32 %v320, 0.0
        %vm322 = vcmp.eq.s32.totalorder %v308, 0
        %v323 = vsel %vm322, %v318, 0.0
        %v324 = vadd.f32 %v323, 0.0
        %v325 = vsub.f32 %v305, %v317
        %v326 = vmul.f32 %v325, 1.442695
        %v327 = vpow.pop %v326
        %v328 = vadd.f32 %v321, %v327
        %vm329 = vcmp.eq.s32.totalorder %v308, 1
        %v330 = vsel %vm329, %v325, 0.0
        %v331 = vadd.f32 %v324, %v330
        %v332 = vsub.f32 %v306, %v317
        %v333 = vmul.f32 %v332, 1.442695
        %v334 = vpow.pop %v333
        %v335 = vadd.f32 %v328, %v334
        %vm336 = vcmp.eq.s32.totalorder %v308, 2
        %v337 = vsel %vm336, %v332, 0.0
        %v338 = vadd.f32 %v331, %v337
        %v339 = vsub.f32 %v307, %v317
        %v340 = vmul.f32 %v339, 1.442695
        %v341 = vpow.pop %v340
        %v342 = vadd.f32 %v335, %v341
        %vm343 = vcmp.eq.s32.totalorder %v308, 3
        %v344 = vsel %vm343, %v339, 0.0
        %v345 = vadd.f32 %v338, %v344
        %v346 = vlog2.pop %v342
        %v347 = vmul.f32 %v346, 0.6931472
        %v348 = vsub.f32 %v347, %v345
        %v349 = vsel %vm309, %v348, 0.0
        %v350 = vld [vmem:[#allocation2] sm:$0x3]
        %v351 = vadd.f32 %v350, %v349
        %352 = vst [vmem:[#allocation2] sm:$0x3] %v351
        %v353 = vld [vmem:[#allocation3] sm:$0x3]
        %v354 = vsel %vm309, 1, 0
        %v355 = vcvt.s32.f32 %v354
        %v356 = vadd.f32 %v353, %v355
        %357 = vst [vmem:[#allocation3] sm:$0x3] %v356
        // Predicated region
        $region41: #{tpu_custom_call.1} parent=27 // pred_check
          %p358 = pneg %p298
        $region42: #{tpu_custom_call.1} parent=27 // pred_check_branch
          %360 = sbr.rel (%p358) target = $region44
        $region43: #{tpu_custom_call.1} parent=27 // pred_region
          %v361 = vld [vmem:[#allocation2] sm:$0x3]
          %v362 = vsel %vm310, %v361, 0.0
          %363 = vadd.xlane.f32.xlu0 %v362
          %v364 = vpop.xlane.xlu0 %363
          %v365 = vrot.slane %v364, 4
          %v366 = vadd.f32 %v364, %v365
          %v367 = vrot.slane %v366, 2
          %v368 = vadd.f32 %v366, %v367
          %v369 = vrot.slane %v368, 1
          %v370 = vadd.f32 %v368, %v369
          %s371 = vtos %v370
          %v372 = vstv %s371
          %vm373 = vcmask 0
          %374 = vst.msk [vmem:[%s291] sm:$0x1] %vm373, %v372
          %v375 = vld [vmem:[#allocation3] sm:$0x3]
          %v376 = vsel %vm310, %v375, 0.0
          %377 = vadd.xlane.f32.xlu0 %v376
          %v378 = vpop.xlane.xlu0 %377
          %v379 = vrot.slane %v378, 4
          %v380 = vadd.f32 %v378, %v379
          %v381 = vrot.slane %v380, 2
          %v382 = vadd.f32 %v380, %v381
          %v383 = vrot.slane %v382, 1
          %v384 = vadd.f32 %v382, %v383
          %s385 = vtos %v384
          %v386 = vstv %s385
          %387 = vst.msk [vmem:[%s297] sm:$0x1] %vm373, %v386
        $region44: #{tpu_custom_call.1} parent=27 // pred_fallthru
          _
        %p388 = scmp.lt.s32.totalorder %s26, 1
        %s389 = scalar_select %p388, %s26, 1
        %p390 = scmp.lt.s32.totalorder %s27, 0
        %s391 = scalar_select %p390, %s27, 0
        %s392 = sadd.s32 %s391, %s389
        %s393 = scalar_lea.vmem %s2, %s392
        %p394 = scmp.lt.s32.totalorder %s26, 1
        %s395 = scalar_select %p394, %s26, 1
        %p396 = scmp.lt.s32.totalorder %s27, 0
        %s397 = scalar_select %p396, %s27, 0
        %s398 = sadd.s32 %s397, %s395
        %s399 = scalar_lea.vmem %s3, %s398
        // Predicated region
        $region45: #{tpu_custom_call.1} parent=27 // pred_check
          %p400 = pneg %p128
        $region46: #{tpu_custom_call.1} parent=27 // pred_check_branch
          %402 = sbr.rel (%p400) target = $region48
        $region47: #{tpu_custom_call.1} parent=27 // pred_region
          _
        $region48: #{tpu_custom_call.1} parent=27 // pred_fallthru
          _
        // Predicated region
        $region49: #{tpu_custom_call.1} parent=27 // pred_check
          %p403 = pneg %p156
        $region50: #{tpu_custom_call.1} parent=27 // pred_check_branch
          %405 = sbr.rel (%p403) target = $region52
        $region51: #{tpu_custom_call.1} parent=27 // pred_region
          _
        $region52: #{tpu_custom_call.1} parent=27 // pred_fallthru
          _
      $region28: #{tpu_custom_call.1} parent=5 // pred_fallthru
        _
      %p406 = scmp.le.s32.totalorder 2, %s16
      // Predicated region
      $region53: #{tpu_custom_call.1} parent=5 // pred_check
        %p407 = pneg %p406
      $region54: #{tpu_custom_call.1} parent=5 // pred_check_branch
        %409 = sbr.rel (%p407) target = $region56
      $region55: #{tpu_custom_call.1} parent=5 // pred_region
        %s410 = ssub.s32 %s16, 2
        // Predicated region
        $region57: #{tpu_custom_call.1} parent=55 // pred_check
          %p411 = pneg %p134
        $region58: #{tpu_custom_call.1} parent=55 // pred_check_branch
          %413 = sbr.rel (%p411) target = $region60
        $region59: #{tpu_custom_call.1} parent=55 // pred_region
          %p414 = scmp.lt.s32.totalorder %s29, 1
          %s415 = scalar_select %p414, %s29, 1
          %p416 = scmp.lt.s32.totalorder %s30, 0
          %s417 = scalar_select %p416, %s30, 0
          %s418 = sadd.s32 %s417, %s415
          %s419 = scalar_lea.vmem %s2, %s418
        $region60: #{tpu_custom_call.1} parent=55 // pred_fallthru
          _
        // Predicated region
        $region61: #{tpu_custom_call.1} parent=55 // pred_check
          %p420 = pneg %p162
        $region62: #{tpu_custom_call.1} parent=55 // pred_check_branch
          %422 = sbr.rel (%p420) target = $region64
        $region63: #{tpu_custom_call.1} parent=55 // pred_region
          %p423 = scmp.lt.s32.totalorder %s29, 1
          %s424 = scalar_select %p423, %s29, 1
          %p425 = scmp.lt.s32.totalorder %s30, 0
          %s426 = scalar_select %p425, %s30, 0
          %s427 = sadd.s32 %s426, %s424
          %s428 = scalar_lea.vmem %s3, %s427
        $region64: #{tpu_custom_call.1} parent=55 // pred_fallthru
          _
      $region56: #{tpu_custom_call.1} parent=5 // pred_fallthru
        _
    $region6: #{tpu_custom_call.1} parent=1 // loop_footer
      %s20 = sadd.s32 1, %s16
    $region7: #{tpu_custom_call.1} parent=1 // loop_footer_branch
      %15 = sbr.rel target = $region3
    $region8: #{tpu_custom_call.1} parent=1 // loop_exit
      _
    %429 = vsyncpa [#allocation5], 1
    %s430 = scalar_lea.sflag [#allocation5], 1
    %431 = vsyncpa %s430, 1
    %432 = vsyncpa [#allocation7], 1
    %s433 = scalar_lea.sflag [#allocation7], 1
    %434 = vsyncpa %s433, 1

</llo_original>
